<compile_context>
chip_gen: v7x
topology: tpu7x:2x2x1
jax: 0.10.0
libtpu: 0.0.40
codegen_flags: <defaults>
</compile_context>

<pallas_src>
import jax
import jax.numpy as jnp
from jax.experimental import pallas as pl
from jax.experimental.pallas import tpu as pltpu


# ----------------------------- kernels ------------------------------------ #

def _linear_block_kernel(x_ref, w_ref, b_ref, o_ref):
    """One plain MXU matmul per grid step: (TB,K) @ (K,M) + bias(1,M).

    Used both by the fused block-diagonal path (K=N*H, M=N*O) and by the
    per-part grid path (K=H, M=O).  Bias is already f32 (cast hoisted to the
    wrapper), accumulation is f32."""
    acc = jnp.dot(x_ref[...], w_ref[...], preferred_element_type=jnp.float32)
    o_ref[...] = (acc + b_ref[...]).astype(o_ref.dtype)


def _make_generic_kernel(n_parts):
    """Fallback for shapes that fit neither the fused nor the aligned per-part
    path: resident weights, static per-part loop (small N only)."""
    def kernel(x_ref, w_ref, b_ref, o_ref):
        # x_ref: (TB, N, H)  w_ref: (N, H, O)  b_ref: (N, 1, O) f32  o_ref: (TB, N, O)
        for i in range(n_parts):
            yi = jnp.dot(x_ref[:, i, :], w_ref[i],
                         preferred_element_type=jnp.float32)
            o_ref[:, i, :] = (yi + b_ref[i]).astype(o_ref.dtype)
    return kernel


# --------------------------- sizing helpers -------------------------------- #

def _round_up(x, m):
    return -(-int(x) // int(m)) * int(m)


def _sublane_multiple(dtype):
    # 8 sublanes of 32-bit; sub-32-bit dtypes pack along sublanes.
    it = jnp.dtype(dtype).itemsize
    return 8 * max(1, 4 // it)


def _lane_bytes(cols, dtype):
    return _round_up(cols, 128) * jnp.dtype(dtype).itemsize


def _padded_block_bytes(shape, dtype):
    """Padding-aware VMEM footprint of one block: last two dims rounded up to
    (sublane-multiple, 128); leading dims multiply."""
    shape = tuple(int(d) for d in shape)
    if len(shape) == 1:
        shape = (1,) + shape
    lead = 1
    for d in shape[:-2]:
        lead *= d
    rows, cols = shape[-2], shape[-1]
    it = jnp.dtype(dtype).itemsize
    return lead * _round_up(rows, _sublane_multiple(dtype)) * _round_up(cols, 128) * it


def _nbytes(a):
    return int(a.size) * jnp.dtype(a.dtype).itemsize


def _vmem_budget_and_limit():
    """Generation-aware VMEM budget (bytes) and scoped limit."""
    try:
        cap = int(pltpu.get_tpu_info().vmem_capacity_bytes)
    except Exception:
        cap = 64 * 1024 * 1024          # conservative if the query is unavailable
    if cap <= 64 * 1024 * 1024:         # v7x-class: 64 MiB VMEM per TensorCore
        return 36 * 2**20, 46 * 2**20
    return 80 * 2**20, 96 * 2**20       # v5e / v6e: 128 MiB physical VMEM


def _pick_batch_tile(B, row_bytes, resident_bytes, budget, sub, max_batch_tile=None):
    """Largest sublane-aligned batch tile whose double-buffered working set
    (row_bytes per batch row, already padded + double-buffered) plus the
    resident weight/bias buffers fits the budget.  Caps the tile so >= 2 tiles
    exist (v7x megacore) when B is large enough."""
    avail = max(budget - resident_bytes, row_bytes * sub)
    tb = int(avail // row_bytes)
    if B >= 2 * sub:                                  # leave >=2 tiles for 2 TCs (v7x)
        tb = min(tb, _round_up(pl.cdiv(B, 2), sub))
    if max_batch_tile is not None:
        tb = min(tb, int(max_batch_tile))
    if tb >= B:
        return int(B)                                  # full dim: always layout-legal
    tb = max((tb // sub) * sub, sub)                   # aligned full tiles; last one masked
    return int(min(tb, B))


# ------------------------------ wrapper ------------------------------------ #

FUSE_MAX_COLS = 1024   # fuse all parts into one matmul while N*H and N*O <= this


def should_fuse(N, H, O):
    return N * H <= FUSE_MAX_COLS and N * O <= FUSE_MAX_COLS


def prepare_params(weights, biases, *, fuse, compute_dtype=None):
    """One-time parameter layout transforms (hoist out of the hot path and
    cache the result if parameters are reused across forward calls).

    weights: [N, O, H] (per-part nn.Linear weight, [out, in]),  biases: [N, O].
    Returns (w, b) matching the kernel layout for the chosen path."""
    N, O, H = weights.shape
    w_nho = jnp.swapaxes(weights, 1, 2)                 # [N, H, O]: K-major RHS
    if compute_dtype is not None:
        w_nho = w_nho.astype(compute_dtype)
    b_f32 = biases.astype(jnp.float32)                  # bias cast hoisted here
    if fuse:
        eye = jnp.eye(N, dtype=w_nho.dtype)
        w_bd = (eye[:, None, :, None] * w_nho[:, :, None, :]).reshape(N * H, N * O)
        return w_bd, b_f32.reshape(1, N * O)
    return w_nho, b_f32.reshape(N, 1, O)


def module_stack_forward(data, weights, biases, *, compute_dtype=None,
                         max_batch_tile=None, prepared=None):
    """data: [B, N, H] (PyTorch layout, input_dim=1)
       weights: [N, O, H], biases: [N, O]
       returns: [B, N, O] (stacked along output_dim=1)."""
    B, N, H = data.shape
    Np, O, Hp = weights.shape
    assert Np == N and Hp == H, "data.shape[input_dim] must equal len(parts)"
    assert biases.shape == (N, O)

    x = data.astype(compute_dtype) if compute_dtype is not None else data
    out_dtype = x.dtype
    fuse = should_fuse(N, H, O)
    if prepared is None:
        prepared = prepare_params(weights, biases, fuse=fuse, compute_dtype=compute_dtype)
    w_in, b_in = prepared

    budget, vmem_limit = _vmem_budget_and_limit()
    sub_x = _sublane_multiple(x.dtype)

    cost = pl.CostEstimate(
        flops=2 * B * N * H * O,
        transcendentals=0,
        bytes_accessed=_nbytes(x) + _nbytes(w_in) + _nbytes(b_in)
        + B * N * O * jnp.dtype(out_dtype).itemsize,
    )
    cparams = lambda sem: pltpu.CompilerParams(
        dimension_semantics=sem, vmem_limit_bytes=vmem_limit)

    # ---- Path 1: fused block-diagonal matmul (small per-part dims) ---- #
    if fuse:
        NH, NO = N * H, N * O
        x2 = x.reshape(B, NH)                            # free, contiguous view
        resident = (2 * _padded_block_bytes((NH, NO), w_in.dtype)
                    + 2 * _padded_block_bytes((1, NO), b_in.dtype))
        row_bytes = 2 * (_lane_bytes(NH, x.dtype) + _lane_bytes(NO, out_dtype))
        tb = _pick_batch_tile(B, row_bytes, resident, budget, sub_x, max_batch_tile)
        nb = pl.cdiv(B, tb)
        out2 = pl.pallas_call(
            _linear_block_kernel,
            out_shape=jax.ShapeDtypeStruct((B, NO), out_dtype),
            grid_spec=pltpu.PrefetchScalarGridSpec(
                num_scalar_prefetch=0,
                grid=(nb,),
                in_specs=[
                    pl.BlockSpec((tb, NH), lambda b: (b, 0)),
                    pl.BlockSpec((NH, NO), lambda b: (0, 0)),   # resident across tiles
                    pl.BlockSpec((1, NO), lambda b: (0, 0)),    # resident f32 bias row
                ],
                out_specs=pl.BlockSpec((tb, NO), lambda b: (b, 0)),
            ),
            compiler_params=cparams(("parallel",)),
            cost_estimate=cost,
        )(x2, w_in, b_in)
        return out2.reshape(B, N, O)

    # ---- Path 2: per-part matmuls with N in the grid (large aligned dims) ---- #
    if H % 128 == 0 and O % 128 == 0:
        x2 = x.reshape(B, N * H)                         # free, contiguous view
        resident = (2 * _padded_block_bytes((H, O), w_in.dtype)
                    + 2 * _padded_block_bytes((1, O), b_in.dtype))
        row_bytes = 2 * (_lane_bytes(H, x.dtype) + _lane_bytes(O, out_dtype))
        tb = _pick_batch_tile(B, row_bytes, resident, budget, sub_x, max_batch_tile)
        nb = pl.cdiv(B, tb)
        out2 = pl.pallas_call(
            _linear_block_kernel,
            out_shape=jax.ShapeDtypeStruct((B, N * O), out_dtype),
            grid_spec=pltpu.PrefetchScalarGridSpec(
                num_scalar_prefetch=0,
                grid=(N, nb),   # part OUTER -> its weight block resident over batch tiles
                in_specs=[
                    pl.BlockSpec((tb, H), lambda i, b: (b, i)),
                    pl.BlockSpec((None, H, O), lambda i, b: (i, 0, 0)),
                    pl.BlockSpec((None, 1, O), lambda i, b: (i, 0, 0)),
                ],
                out_specs=pl.BlockSpec((tb, O), lambda i, b: (b, i)),
            ),
            compiler_params=cparams(("parallel", "parallel")),
            cost_estimate=cost,
        )(x2, w_in, b_in)
        return out2.reshape(B, N, O)

    # ---- Path 3: generic fallback (unaligned H/O above fuse threshold) ---- #
    resident = (2 * _padded_block_bytes((N, H, O), w_in.dtype)
                + 2 * _padded_block_bytes((N, 1, O), b_in.dtype))
    row_bytes = 2 * (_round_up(N, sub_x) * _lane_bytes(H, x.dtype)
                     + _round_up(N, _sublane_multiple(out_dtype)) * _lane_bytes(O, out_dtype))
    tb = _pick_batch_tile(B, row_bytes, resident, budget, sub_x, max_batch_tile)
    nb = pl.cdiv(B, tb)
    return pl.pallas_call(
        _make_generic_kernel(N),
        out_shape=jax.ShapeDtypeStruct((B, N, O), out_dtype),
        grid_spec=pltpu.PrefetchScalarGridSpec(
            num_scalar_prefetch=0,
            grid=(nb,),
            in_specs=[
                pl.BlockSpec((tb, N, H), lambda b: (b, 0, 0)),
                pl.BlockSpec((N, H, O), lambda b: (0, 0, 0)),
                pl.BlockSpec((N, 1, O), lambda b: (0, 0, 0)),
            ],
            out_specs=pl.BlockSpec((tb, N, O), lambda b: (b, 0, 0)),
        ),
        compiler_params=cparams(("parallel",)),
        cost_estimate=cost,
    )(x, w_in, b_in)


# ------------------------------- demo -------------------------------------- #

if __name__ == "__main__":
    def ref_forward(x, w, b):
        # Pure-JAX reference of ModuleStack.forward (per-part Linear + stack).
        return jnp.stack([x[:, i, :] @ w[i].T + b[i] for i in range(w.shape[0])], axis=1)

    key = jax.random.PRNGKey(0)

    # Test 1: fused block-diagonal path (small per-part dims), single tile.
    B, N, H, O = 2, 4, 32, 32
    k1, k2, k3, key = jax.random.split(key, 4)
    x = jax.random.normal(k1, (B, N, H), dtype=jnp.float32)
    w = jax.random.normal(k2, (N, O, H), dtype=jnp.float32) * (1.0 / jnp.sqrt(H))
    b = 0.1 * jax.random.normal(k3, (N, O), dtype=jnp.float32)
    out = jax.block_until_ready(module_stack_forward(x, w, b))
    assert out.shape == (B, N, O)
    assert jnp.allclose(out, ref_forward(x, w, b), atol=1e-5, rtol=1e-5)

    # Test 2: fused path with several batch tiles and a partial last tile (B % tb != 0).
    B2 = 20
    k1, key = jax.random.split(key)
    x2 = jax.random.normal(k1, (B2, N, H), dtype=jnp.float32)
    out2 = jax.block_until_ready(module_stack_forward(x2, w, b, max_batch_tile=8))
    assert out2.shape == (B2, N, O)
    assert jnp.allclose(out2, ref_forward(x2, w, b), atol=1e-5, rtol=1e-5)

    # Test 3: per-part grid path (N*H above the fusion threshold, 128-aligned H/O).
    B3, N3, H3, O3 = 8, 2, 640, 256
    k1, k2, k3, key = jax.random.split(key, 4)
    x3 = jax.random.normal(k1, (B3, N3, H3), dtype=jnp.float32)
    w3 = jax.random.normal(k2, (N3, O3, H3), dtype=jnp.float32) * (1.0 / jnp.sqrt(H3))
    b3 = 0.1 * jax.random.normal(k3, (N3, O3), dtype=jnp.float32)
    out3 = jax.block_until_ready(module_stack_forward(x3, w3, b3))
    assert out3.shape == (B3, N3, O3)
    assert jnp.allclose(out3, ref_forward(x3, w3, b3), atol=1e-4, rtol=1e-4)

    print("KERNEL_OK")
</pallas_src>

<mosaic_0001>
module attributes {stable_mosaic.version = 11 : i64} {
  func.func @_linear_block_kernel(%arg0: i32, %arg1: memref<2x128xf32, #tpu.memory_space<vmem>>, %arg2: memref<128x128xf32, #tpu.memory_space<vmem>>, %arg3: memref<1x128xf32, #tpu.memory_space<vmem>>, %arg4: memref<2x128xf32, #tpu.memory_space<vmem>>) attributes {dimension_semantics = [#tpu.dimension_semantics<parallel>], iteration_bounds = array<i64: 1>, scalar_prefetch = 0 : i64, scratch_operands = 0 : i64, tpu.core_type = #tpu.core_type<tc>, window_params = [{transform_indices = @transform_0, window_bounds = array<i64: 2, 128>}, {pipeline_mode = #tpu.pipeline_mode<synchronous>, transform_indices = @transform_1, window_bounds = array<i64: 128, 128>}, {pipeline_mode = #tpu.pipeline_mode<synchronous>, transform_indices = @transform_2, window_bounds = array<i64: 1, 128>}, {transform_indices = @transform_3, window_bounds = array<i64: 2, 128>}]} {
    %c0 = arith.constant 0 : index
    %c0_0 = arith.constant 0 : index
    %0 = vector.load %arg1[%c0, %c0_0] : memref<2x128xf32, #tpu.memory_space<vmem>>, vector<2x128xf32>
    %c0_1 = arith.constant 0 : index
    %c0_2 = arith.constant 0 : index
    %1 = vector.load %arg2[%c0_1, %c0_2] : memref<128x128xf32, #tpu.memory_space<vmem>>, vector<128x128xf32>
    %cst = arith.constant dense<0.000000e+00> : vector<2x128xf32>
    %2 = tpu.matmul %0, %1, %cst {dimension_numbers = #tpu.dot_dimension_numbers<[1], [0], [0], [1], [0, 0, 1, 1], [], []>} : vector<2x128xf32>, vector<128x128xf32>, vector<2x128xf32> -> vector<2x128xf32>
    %c0_3 = arith.constant 0 : index
    %c0_4 = arith.constant 0 : index
    %3 = vector.load %arg3[%c0_3, %c0_4] : memref<1x128xf32, #tpu.memory_space<vmem>>, vector<1x128xf32>
    %4 = vector.broadcast %3 : vector<1x128xf32> to vector<2x128xf32>
    %5 = arith.addf %2, %4 : vector<2x128xf32>
    %c0_5 = arith.constant 0 : index
    %c0_6 = arith.constant 0 : index
    %6 = vector.load %arg4[%c0_5, %c0_6] : memref<2x128xf32, #tpu.memory_space<vmem>>, vector<2x128xf32>
    tpu.vector_store %arg4[%c0_5, %c0_6], %5 {strides = array<i32>} : memref<2x128xf32, #tpu.memory_space<vmem>>, vector<2x128xf32>,
    return
  }
  func.func @transform_0(%arg0: i32) -> (i32, i32) {
    %c0_i32 = arith.constant 0 : i32
    %c0_i32_0 = arith.constant 0 : i32
    return %arg0, %c0_i32 : i32, i32
  }
  func.func @transform_1(%arg0: i32) -> (i32, i32) {
    %c0_i32 = arith.constant 0 : i32
    %c0_i32_0 = arith.constant 0 : i32
    %c0_i32_1 = arith.constant 0 : i32
    return %c0_i32, %c0_i32_0 : i32, i32
  }
  func.func @transform_2(%arg0: i32) -> (i32, i32) {
    %c0_i32 = arith.constant 0 : i32
    %c0_i32_0 = arith.constant 0 : i32
    %c0_i32_1 = arith.constant 0 : i32
    return %c0_i32, %c0_i32_0 : i32, i32
  }
  func.func @transform_3(%arg0: i32) -> (i32, i32) {
    %c0_i32 = arith.constant 0 : i32
    %c0_i32_0 = arith.constant 0 : i32
    return %arg0, %c0_i32 : i32, i32
  }
}

</mosaic_0001>

<llo_original>
// kernel: tpu_custom_call.1
$region0: #{tpu_custom_call.1}
  #allocation0 [shape = 'u32[]', space=smem, size = 0x4, offset = 0x4, fixed_abs, tag = 'smem constant byte address 0x4 - core index']
  #allocation1 [shape = 'u32[144,128]{1,0:T(1,128)}', space=vmem, size = 0x12000, scoped, tag = 'internal scratch']
  %s0 = inlined_call_operand.hbm [shape: f32[2,128], index: 0, kind: input, shape index: {}]
  %s1 = inlined_call_operand.hbm [shape: f32[128,128], index: 1, kind: input, shape index: {}]
  %s2 = inlined_call_operand.vmem [shape: f32[1,128], index: 2, kind: input, shape index: {}]
  %s3 = inlined_call_operand.hbm [shape: f32[2,128], index: 3, kind: output, shape index: {}]
  %s4 = sld [smem:[#allocation0]]
  $region30: #{tpu_custom_call.1} parent=0
    _
  %s6 = ssub.s32 1, %s4
  %s7 = scalar_select 0, %s6, %s4
  $region1: #{tpu_custom_call.1} parent=0
    #allocation2 [shape = 'u8[1024]{0}', space=vmem, size = 0x400, scoped, tag = 'input window, operand 0, single buffered']
    #allocation3 [shape = 's32[1]{0}', space=sflag, size = 0x4, scoped, tag = 'scoped memory for tpu_custom_call.1']
    #allocation4 [shape = 's32[1]{0}', space=sflag, size = 0x4, scoped, tag = 'scoped memory for tpu_custom_call.1']
    #allocation5 [shape = 'u8[65536]{0}', space=vmem, size = 0x10000, scoped, tag = 'input window, operand 1, single buffered']
    #allocation6 [shape = 's32[1]{0}', space=sflag, size = 0x4, scoped, tag = 'scoped memory for tpu_custom_call.1']
    #allocation7 [shape = 'u8[1024]{0}', space=vmem, size = 0x400, scoped, tag = 'output window, operand 0, single buffered']
    %8 = vsyncpa [#allocation3], 0
    %9 = vsyncpa [#allocation6], 0
    %10 = vsyncpa [#allocation4], 0
    // Predicated region
    $region2: #{tpu_custom_call.1} parent=1 // pred_check
      _
    $region3: #{tpu_custom_call.1} parent=1 // pred_check_branch
      %12 = sbr.rel (0) target = $region5
    $region4: #{tpu_custom_call.1} parent=1 // pred_region
      %s14 = ssub.s32 32, 32
      %15 = vsyncadd [#allocation3], %s14
      %s17 = sshll.u32 [#allocation2], 4
      %s18 = int_to_ptr.vmem [resolvable:$true] %s17
      %20 = dma.hbm_to_vmem [thread:$0]  %s0, 32, %s18, [#allocation3]
    $region5: #{tpu_custom_call.1} parent=1 // pred_fallthru
      _
    // Predicated region
    $region6: #{tpu_custom_call.1} parent=1 // pred_check
      _
    $region7: #{tpu_custom_call.1} parent=1 // pred_check_branch
      %22 = sbr.rel (0) target = $region9
    $region8: #{tpu_custom_call.1} parent=1 // pred_region
      %s24 = ssub.s32 2048, 2048
      %25 = vsyncadd [#allocation6], %s24
      %s26 = sshll.u32 [#allocation5], 4
      %s27 = int_to_ptr.vmem [resolvable:$true] %s26
      %32 = dma.hbm_to_vmem [thread:$0]  %s1, 2048, %s27, [#allocation6], 128, 128, 8
    $region9: #{tpu_custom_call.1} parent=1 // pred_fallthru
      _
    // Predicated region
    $region10: #{tpu_custom_call.1} parent=1 // pred_check
      _
    $region11: #{tpu_custom_call.1} parent=1 // pred_check_branch
      %34 = sbr.rel (0) target = $region13
    $region12: #{tpu_custom_call.1} parent=1 // pred_region
      _
    $region13: #{tpu_custom_call.1} parent=1 // pred_fallthru
      _
    // Predicated region
    $region14: #{tpu_custom_call.1} parent=1 // pred_check
      _
    $region15: #{tpu_custom_call.1} parent=1 // pred_check_branch
      %36 = sbr.rel (0) target = $region17
    $region16: #{tpu_custom_call.1} parent=1 // pred_region
      %37 = dma.done [#allocation3], 32
    $region17: #{tpu_custom_call.1} parent=1 // pred_fallthru
      _
    // Predicated region
    $region18: #{tpu_custom_call.1} parent=1 // pred_check
      _
    $region19: #{tpu_custom_call.1} parent=1 // pred_check_branch
      %39 = sbr.rel (0) target = $region21
    $region20: #{tpu_custom_call.1} parent=1 // pred_region
      %40 = dma.done [#allocation6], 2048
    $region21: #{tpu_custom_call.1} parent=1 // pred_fallthru
      _
    %v41 = vld [vmem:[#allocation2] sm:$0x3]
    %v42 = vld [vmem:[#allocation5] sm:$0xff]
    %v43 = vld [vmem:[#allocation5 + $0x8] sm:$0xff]
    %v44 = vld [vmem:[#allocation5 + $0x10] sm:$0xff]
    %v45 = vld [vmem:[#allocation5 + $0x18] sm:$0xff]
    %v46 = vld [vmem:[#allocation5 + $0x20] sm:$0xff]
    %v47 = vld [vmem:[#allocation5 + $0x28] sm:$0xff]
    %v48 = vld [vmem:[#allocation5 + $0x30] sm:$0xff]
    %v49 = vld [vmem:[#allocation5 + $0x38] sm:$0xff]
    %v50 = vld [vmem:[#allocation5 + $0x40] sm:$0xff]
    %v51 = vld [vmem:[#allocation5 + $0x48] sm:$0xff]
    %v52 = vld [vmem:[#allocation5 + $0x50] sm:$0xff]
    %v53 = vld [vmem:[#allocation5 + $0x58] sm:$0xff]
    %v54 = vld [vmem:[#allocation5 + $0x60] sm:$0xff]
    %v55 = vld [vmem:[#allocation5 + $0x68] sm:$0xff]
    %v56 = vld [vmem:[#allocation5 + $0x70] sm:$0xff]
    %v57 = vld [vmem:[#allocation5 + $0x78] sm:$0xff]
    %v58 = vld [vmem:[%s2] sm:$0x1]
    %v60 = vlaneseq
    %v61 = vshrl.u32 %v60, 7
    %v62 = vsub.s32 0, %v61
    %v63 = vrot.slane %v58, %v62
    %65 = vmatprep.subr.mxu0 0.0
    %66 = vmatpush1.msra.mxu0 %v42
    %67 = vmatprep.subr.mxu0 0.0
    %68 = vmatpush1.msra.mxu0 %v43
    %69 = vmatprep.subr.mxu0 0.0
    %70 = vmatpush1.msra.mxu0 %v44
    %71 = vmatprep.subr.mxu0 0.0
    %72 = vmatpush1.msra.mxu0 %v45
    %73 = vmatprep.subr.mxu0 0.0
    %74 = vmatpush1.msra.mxu0 %v46
    %75 = vmatprep.subr.mxu0 0.0
    %76 = vmatpush1.msra.mxu0 %v47
    %77 = vmatprep.subr.mxu0 0.0
    %78 = vmatpush1.msra.mxu0 %v48
    %79 = vmatprep.subr.mxu0 0.0
    %80 = vmatpush1.msra.mxu0 %v49
    %81 = vmatprep.subr.mxu0 0.0
    %82 = vmatpush1.msra.mxu0 %v50
    %83 = vmatprep.subr.mxu0 0.0
    %84 = vmatpush1.msra.mxu0 %v51
    %85 = vmatprep.subr.mxu0 0.0
    %86 = vmatpush1.msra.mxu0 %v52
    %87 = vmatprep.subr.mxu0 0.0
    %88 = vmatpush1.msra.mxu0 %v53
    %89 = vmatprep.subr.mxu0 0.0
    %90 = vmatpush1.msra.mxu0 %v54
    %91 = vmatprep.subr.mxu0 0.0
    %92 = vmatpush1.msra.mxu0 %v55
    %93 = vmatprep.subr.mxu0 0.0
    %94 = vmatpush1.msra.mxu0 %v56
    %95 = vmatprep.subr.mxu0 0.0
    %96 = vmatpush1.msra.mxu0 %v57
    %97 = vmatprep.subr.mxu0 0.0
    %98 = vmatpush1.msra.mxu0 0.0
    %99 = vmatprep.subr.mxu0 0.0
    %100 = vmatpush1.msra.mxu0 0.0
    %101 = vmatprep.subr.mxu0 0.0
    %102 = vmatpush1.msra.mxu0 0.0
    %103 = vmatprep.subr.mxu0 0.0
    %104 = vmatpush1.msra.mxu0 0.0
    %105 = vmatprep.subr.mxu0 0.0
    %106 = vmatpush1.msra.mxu0 0.0
    %107 = vmatprep.subr.mxu0 0.0
    %108 = vmatpush1.msra.mxu0 0.0
    %109 = vmatprep.subr.mxu0 0.0
    %110 = vmatpush1.msra.mxu0 0.0
    %111 = vmatprep.subr.mxu0 0.0
    %112 = vmatpush1.msra.mxu0 0.0
    %113 = vmatprep.subr.mxu0 0.0
    %114 = vmatpush1.msra.mxu0 0.0
    %115 = vmatprep.subr.mxu0 0.0
    %116 = vmatpush1.msra.mxu0 0.0
    %117 = vmatprep.subr.mxu0 0.0
    %118 = vmatpush1.msra.mxu0 0.0
    %119 = vmatprep.subr.mxu0 0.0
    %120 = vmatpush1.msra.mxu0 0.0
    %121 = vmatprep.subr.mxu0 0.0
    %122 = vmatpush1.msra.mxu0 0.0
    %123 = vmatprep.subr.mxu0 0.0
    %124 = vmatpush1.msra.mxu0 0.0
    %125 = vmatprep.subr.mxu0 0.0
    %126 = vmatpush1.msra.mxu0 0.0
    %127 = vmatprep.subr.mxu0 0.0
    %128 = vmatpush1.msra.mxu0 0.0
    %129 = vmatprep.mubr.f32.mxu0 0.0
    %130 = vmatmul.mubr.f32.gmra.mrb[0].mxu0 %v41
    %v131 = vpop.f32.mrb[0].mxu0
    %v132 = vadd.f32 %v63, %v131
    %v133 = vpop.f32.mrb[0].mxu0
    %134 = vdwg.mxu0
    %135 = vst [vmem:[#allocation7] sm:$0x3] %v132
    // Predicated region
    $region22: #{tpu_custom_call.1} parent=1 // pred_check
      _
    $region23: #{tpu_custom_call.1} parent=1 // pred_check_branch
      %137 = sbr.rel (0) target = $region25
    $region24: #{tpu_custom_call.1} parent=1 // pred_region
      %s139 = ssub.s32 32, 32
      %140 = vsyncadd [#allocation4], %s139
      %s142 = sshll.u32 [#allocation7], 4
      %s143 = int_to_ptr.vmem [resolvable:$true] %s142
      %145 = dma.vmem_to_hbm [thread:$0]  %s143, 32, %s3, [#allocation4]
    $region25: #{tpu_custom_call.1} parent=1 // pred_fallthru
      _
    // Predicated region
    $region26: #{tpu_custom_call.1} parent=1 // pred_check
      _
    $region27: #{tpu_custom_call.1} parent=1 // pred_check_branch
      %147 = sbr.rel (0) target = $region29
    $region28: #{tpu_custom_call.1} parent=1 // pred_region
      %148 = dma.done [#allocation4], 32
    $region29: #{tpu_custom_call.1} parent=1 // pred_fallthru
      _
    %149 = vsyncpa [#allocation3], 1
    %150 = vsyncpa [#allocation6], 1
    %151 = vsyncpa [#allocation4], 1

</llo_original>
